<compile_context>
chip_gen: v7x
topology: tpu7x:2x2x1
jax: 0.10.0
libtpu: 0.0.40
codegen_flags: <defaults>
</compile_context>

<pallas_src>
import functools

import jax
import jax.numpy as jnp
from jax.experimental import pallas as pl
from jax.experimental.pallas import tpu as pltpu


def _instance_norm_kernel(x_ref, scale_ref, bias_ref, o_ref, *, eps, inv_m, inv_nm1):
    # x_ref/o_ref: (ROW_TILE, M_pad)   scale_ref/bias_ref: (1, M_pad)
    # Padded lanes (if any) hold zeros, so they contribute nothing to the
    # sums; inv_m / inv_nm1 are built from the true element count M.
    x = x_ref[...].astype(jnp.float32)
    s = jnp.sum(x, axis=-1, keepdims=True)              # (ROW_TILE, 1)
    sq = jnp.sum(x * x, axis=-1, keepdims=True)         # (ROW_TILE, 1)
    mean = s * inv_m
    # Unbiased variance (ddof=1), matching torch.Tensor.var's default.
    var = jnp.maximum(sq - s * mean, 0.0) * inv_nm1
    inv = jax.lax.rsqrt(var + eps)                       # EUP slot
    scale = scale_ref[...].astype(jnp.float32)           # (1, M_pad)
    bias = bias_ref[...].astype(jnp.float32)
    a = inv * scale                                      # (ROW_TILE, M_pad)
    b = bias - mean * a
    o_ref[...] = (x * a + b).astype(o_ref.dtype)


def instance_norm(x, weight, bias, eps=1e-5, target_block_bytes=4 * 1024 * 1024):
    """InstanceNorm forward. x: (N, C, H, W); weight/bias: (H,) == (d_model,)."""
    n, c, h, w = x.shape
    assert weight.shape == (h,) and bias.shape == (h,), (
        "weight/bias length must equal x.shape[2] (d_model), per the module's "
        "unsqueeze(0).unsqueeze(2) broadcast")

    m = h * w
    rows = n * c
    lane, sub = 128, 8

    x2d = x.reshape(rows, m)
    # Expand per-d_model affine params to per-flat-(h, w) vectors (layout
    # plumbing only): flat index h_idx * W + w_idx -> weight[h_idx].
    scale_row = jnp.repeat(weight, w).reshape(1, m)
    bias_row = jnp.repeat(bias, w).reshape(1, m)

    # Lane-dense layout: pad the last dim up to a multiple of 128 with zeros
    # (only taken when M isn't already aligned; zeros vanish from the sums).
    m_pad = ((m + lane - 1) // lane) * lane
    if m_pad != m:
        pad = ((0, 0), (0, m_pad - m))
        x2d = jnp.pad(x2d, pad)
        scale_row = jnp.pad(scale_row, pad)
        bias_row = jnp.pad(bias_row, pad)

    # --- generation-aware tile sizing --------------------------------------
    try:
        vmem_cap = int(pltpu.get_tpu_info().vmem_capacity_bytes)
    except Exception:
        vmem_cap = 64 * 1024 * 1024                 # v7x-safe fallback (per TC)
    vmem_limit = (vmem_cap * 3) // 4                # 96 MiB (v5e/v6e) / 48 MiB (v7x)
    vmem_budget = (vmem_limit * 2) // 3             # what tiles may actually use

    itemsize = jnp.dtype(x.dtype).itemsize
    # Per tile row: double-buffered in + out blocks (x dtype) plus ~2 block-
    # sized f32 temporaries live in the kernel body.
    per_row_bytes = (4 * itemsize + 2 * 4) * m_pad
    budget_rows = max(sub, vmem_budget // per_row_bytes)
    target_rows = max(sub, target_block_bytes // (m_pad * itemsize))
    row_tile = min(budget_rows, target_rows)
    row_tile = max(sub, (row_tile // sub) * sub)
    # Keep at least 2 grid steps when rows permit (v7x megacore sharding).
    if rows >= 2 * sub:
        half = ((pl.cdiv(rows, 2) + sub - 1) // sub) * sub
        row_tile = min(row_tile, half)
    if row_tile >= rows:
        row_tile = rows                             # full-extent block: always legal

    grid_rows = pl.cdiv(rows, row_tile)
    # No row padding: a ragged trailing block is masked by Pallas on the write
    # side; OOB reads in that tile are don't-care (rows are independent).

    kernel = functools.partial(
        _instance_norm_kernel,
        eps=float(eps),
        inv_m=1.0 / float(m),
        # Guard H*W == 1 (torch's unbiased var would be NaN there anyway).
        inv_nm1=1.0 / float(max(m - 1, 1)),
    )

    out = pl.pallas_call(
        kernel,
        out_shape=jax.ShapeDtypeStruct((rows, m_pad), x.dtype),
        grid_spec=pltpu.PrefetchScalarGridSpec(
            num_scalar_prefetch=0,
            grid=(grid_rows,),
            in_specs=[
                pl.BlockSpec((row_tile, m_pad), lambda i: (i, 0)),
                pl.BlockSpec((1, m_pad), lambda i: (0, 0)),
                pl.BlockSpec((1, m_pad), lambda i: (0, 0)),
            ],
            out_specs=pl.BlockSpec((row_tile, m_pad), lambda i: (i, 0)),
        ),
        compiler_params=pltpu.CompilerParams(
            dimension_semantics=("parallel",),
            vmem_limit_bytes=int(vmem_limit),
        ),
    )(x2d, scale_row, bias_row)

    if m_pad != m:
        out = out[:, :m]
    return out.reshape(n, c, h, w)


if __name__ == "__main__":
    key = jax.random.PRNGKey(0)
    kx, kw, kb = jax.random.split(key, 3)

    batch, channels, d_model, spatial_w = 2, 4, 16, 16
    eps = 1e-5

    x = jax.random.normal(kx, (batch, channels, d_model, spatial_w),
                          dtype=jnp.float32)
    # Module init is weight=ones, bias=zeros; use non-trivial deterministic
    # values so the affine path is actually exercised.
    weight = 1.0 + 0.1 * jax.random.normal(kw, (d_model,), dtype=jnp.float32)
    bias = 0.1 * jax.random.normal(kb, (d_model,), dtype=jnp.float32)

    y = instance_norm(x, weight, bias, eps=eps)
    jax.block_until_ready(y)

    # Pure-JAX reference mirroring the PyTorch forward exactly.
    mean = jnp.mean(x, axis=(2, 3), keepdims=True)
    var = jnp.var(x, axis=(2, 3), keepdims=True, ddof=1)   # torch.var default: unbiased
    ref = (x - mean) / jnp.sqrt(var + eps)
    ref = ref * weight[None, None, :, None] + bias[None, None, :, None]

    assert jnp.allclose(y, ref, atol=5e-5, rtol=5e-5), "mismatch vs reference"

    print("KERNEL_OK")
</pallas_src>

<mosaic_0001>
module attributes {stable_mosaic.version = 11 : i64} {
  func.func @_instance_norm_kernel(%arg0: i32, %arg1: memref<8x256xf32, #tpu.memory_space<vmem>>, %arg2: memref<1x256xf32, #tpu.memory_space<vmem>>, %arg3: memref<1x256xf32, #tpu.memory_space<vmem>>, %arg4: memref<8x256xf32, #tpu.memory_space<vmem>>) attributes {dimension_semantics = [#tpu.dimension_semantics<parallel>], iteration_bounds = array<i64: 1>, scalar_prefetch = 0 : i64, scratch_operands = 0 : i64, tpu.core_type = #tpu.core_type<tc>, window_params = [{transform_indices = @transform_0, window_bounds = array<i64: 8, 256>}, {pipeline_mode = #tpu.pipeline_mode<synchronous>, transform_indices = @transform_1, window_bounds = array<i64: 1, 256>}, {pipeline_mode = #tpu.pipeline_mode<synchronous>, transform_indices = @transform_2, window_bounds = array<i64: 1, 256>}, {transform_indices = @transform_3, window_bounds = array<i64: 8, 256>}]} {
    %c0 = arith.constant 0 : index
    %c0_0 = arith.constant 0 : index
    %0 = vector.load %arg1[%c0, %c0_0] : memref<8x256xf32, #tpu.memory_space<vmem>>, vector<8x256xf32>
    %cst = arith.constant dense<0.000000e+00> : vector<8xf32>
    %1 = vector.multi_reduction <add>, %0, %cst [1] : vector<8x256xf32> to vector<8xf32>
    %2 = vector.shape_cast %1 : vector<8xf32> to vector<8x1xf32>
    %3 = arith.mulf %0, %0 : vector<8x256xf32>
    %cst_1 = arith.constant dense<0.000000e+00> : vector<8xf32>
    %4 = vector.multi_reduction <add>, %3, %cst_1 [1] : vector<8x256xf32> to vector<8xf32>
    %5 = vector.shape_cast %4 : vector<8xf32> to vector<8x1xf32>
    %cst_2 = arith.constant 3.906250e-03 : f32
    %6 = vector.broadcast %cst_2 : f32 to vector<8x1xf32>
    %7 = arith.mulf %2, %6 : vector<8x1xf32>
    %8 = arith.mulf %2, %7 : vector<8x1xf32>
    %9 = arith.subf %5, %8 : vector<8x1xf32>
    %cst_3 = arith.constant 0.000000e+00 : f32
    %10 = vector.broadcast %cst_3 : f32 to vector<8x1xf32>
    %11 = arith.maximumf %9, %10 : vector<8x1xf32>
    %cst_4 = arith.constant 0.00392156886 : f32
    %12 = vector.broadcast %cst_4 : f32 to vector<8x1xf32>
    %13 = arith.mulf %11, %12 : vector<8x1xf32>
    %cst_5 = arith.constant 9.99999974E-6 : f32
    %14 = vector.broadcast %cst_5 : f32 to vector<8x1xf32>
    %15 = arith.addf %13, %14 : vector<8x1xf32>
    %16 = math.rsqrt %15 : vector<8x1xf32>
    %c0_6 = arith.constant 0 : index
    %c0_7 = arith.constant 0 : index
    %17 = vector.load %arg2[%c0_6, %c0_7] : memref<1x256xf32, #tpu.memory_space<vmem>>, vector<1x256xf32>
    %c0_8 = arith.constant 0 : index
    %c0_9 = arith.constant 0 : index
    %18 = vector.load %arg3[%c0_8, %c0_9] : memref<1x256xf32, #tpu.memory_space<vmem>>, vector<1x256xf32>
    %19 = vector.broadcast %16 : vector<8x1xf32> to vector<8x256xf32>
    %20 = vector.broadcast %17 : vector<1x256xf32> to vector<8x256xf32>
    %21 = arith.mulf %19, %20 : vector<8x256xf32>
    %22 = vector.broadcast %7 : vector<8x1xf32> to vector<8x256xf32>
    %23 = arith.mulf %22, %21 : vector<8x256xf32>
    %24 = vector.broadcast %18 : vector<1x256xf32> to vector<8x256xf32>
    %25 = arith.subf %24, %23 : vector<8x256xf32>
    %26 = arith.mulf %0, %21 : vector<8x256xf32>
    %27 = arith.addf %26, %25 : vector<8x256xf32>
    %c0_10 = arith.constant 0 : index
    %c0_11 = arith.constant 0 : index
    %28 = vector.load %arg4[%c0_10, %c0_11] : memref<8x256xf32, #tpu.memory_space<vmem>>, vector<8x256xf32>
    tpu.vector_store %arg4[%c0_10, %c0_11], %27 {strides = array<i32>} : memref<8x256xf32, #tpu.memory_space<vmem>>, vector<8x256xf32>,
    return
  }
  func.func @transform_0(%arg0: i32) -> (i32, i32) {
    %c0_i32 = arith.constant 0 : i32
    %c0_i32_0 = arith.constant 0 : i32
    return %arg0, %c0_i32 : i32, i32
  }
  func.func @transform_1(%arg0: i32) -> (i32, i32) {
    %c0_i32 = arith.constant 0 : i32
    %c0_i32_0 = arith.constant 0 : i32
    %c0_i32_1 = arith.constant 0 : i32
    return %c0_i32, %c0_i32_0 : i32, i32
  }
  func.func @transform_2(%arg0: i32) -> (i32, i32) {
    %c0_i32 = arith.constant 0 : i32
    %c0_i32_0 = arith.constant 0 : i32
    %c0_i32_1 = arith.constant 0 : i32
    return %c0_i32, %c0_i32_0 : i32, i32
  }
  func.func @transform_3(%arg0: i32) -> (i32, i32) {
    %c0_i32 = arith.constant 0 : i32
    %c0_i32_0 = arith.constant 0 : i32
    return %arg0, %c0_i32 : i32, i32
  }
}

</mosaic_0001>

<llo_original>
// kernel: tpu_custom_call.1
$region0: #{tpu_custom_call.1}
  #allocation0 [shape = 'u32[]', space=smem, size = 0x4, offset = 0x4, fixed_abs, tag = 'smem constant byte address 0x4 - core index']
  #allocation1 [shape = 'u32[144,128]{1,0:T(1,128)}', space=vmem, size = 0x12000, scoped, tag = 'internal scratch']
  %s0 = inlined_call_operand.hbm [shape: f32[8,256], index: 0, kind: input, shape index: {}]
  %s1 = inlined_call_operand.vmem [shape: f32[1,256], index: 1, kind: input, shape index: {}]
  %s2 = inlined_call_operand.vmem [shape: f32[1,256], index: 2, kind: input, shape index: {}]
  %s3 = inlined_call_operand.hbm [shape: f32[8,256], index: 3, kind: output, shape index: {}]
  %s4 = sld [smem:[#allocation0]]
  $region26: #{tpu_custom_call.1} parent=0
    _
  %s6 = ssub.s32 1, %s4
  %s7 = scalar_select 0, %s6, %s4
  $region1: #{tpu_custom_call.1} parent=0
    #allocation2 [shape = 'u8[8192]{0}', space=vmem, size = 0x2000, scoped, tag = 'input window, operand 0, single buffered']
    #allocation3 [shape = 's32[1]{0}', space=sflag, size = 0x4, scoped, tag = 'scoped memory for tpu_custom_call.1']
    #allocation4 [shape = 's32[1]{0}', space=sflag, size = 0x4, scoped, tag = 'scoped memory for tpu_custom_call.1']
    #allocation5 [shape = 'u8[8192]{0}', space=vmem, size = 0x2000, scoped, tag = 'output window, operand 0, single buffered']
    %8 = vsyncpa [#allocation3], 0
    %9 = vsyncpa [#allocation4], 0
    // Predicated region
    $region2: #{tpu_custom_call.1} parent=1 // pred_check
      _
    $region3: #{tpu_custom_call.1} parent=1 // pred_check_branch
      %11 = sbr.rel (0) target = $region5
    $region4: #{tpu_custom_call.1} parent=1 // pred_region
      %s13 = ssub.s32 256, 256
      %14 = vsyncadd [#allocation3], %s13
      %s16 = sshll.u32 [#allocation2], 4
      %s17 = int_to_ptr.vmem [resolvable:$true] %s16
      %19 = dma.hbm_to_vmem [thread:$0]  %s0, 256, %s17, [#allocation3]
    $region5: #{tpu_custom_call.1} parent=1 // pred_fallthru
      _
    // Predicated region
    $region6: #{tpu_custom_call.1} parent=1 // pred_check
      _
    $region7: #{tpu_custom_call.1} parent=1 // pred_check_branch
      %21 = sbr.rel (0) target = $region9
    $region8: #{tpu_custom_call.1} parent=1 // pred_region
      _
    $region9: #{tpu_custom_call.1} parent=1 // pred_fallthru
      _
    // Predicated region
    $region10: #{tpu_custom_call.1} parent=1 // pred_check
      _
    $region11: #{tpu_custom_call.1} parent=1 // pred_check_branch
      %23 = sbr.rel (0) target = $region13
    $region12: #{tpu_custom_call.1} parent=1 // pred_region
      _
    $region13: #{tpu_custom_call.1} parent=1 // pred_fallthru
      _
    // Predicated region
    $region14: #{tpu_custom_call.1} parent=1 // pred_check
      _
    $region15: #{tpu_custom_call.1} parent=1 // pred_check_branch
      %25 = sbr.rel (0) target = $region17
    $region16: #{tpu_custom_call.1} parent=1 // pred_region
      %26 = dma.done [#allocation3], 256
    $region17: #{tpu_custom_call.1} parent=1 // pred_fallthru
      _
    %v27 = vld [vmem:[#allocation2] sm:$0xff]
    %v28 = vld [vmem:[#allocation2 + $0x8] sm:$0xff]
    %v29 = vadd.f32 %v27, %v28
    %30 = vadd.xlane.f32.xlu0 %v29
    %v31 = vpop.xlane.xlu0 %30
    %v32 = vmul.f32 %v27, %v27
    %v33 = vmul.f32 %v28, %v28
    %v34 = vadd.f32 %v32, %v33
    %35 = vadd.xlane.f32.xlu0 %v34
    %v36 = vpop.xlane.xlu0 %35
    %v37 = vmul.f32 %v31, 0.00390625
    %v38 = vmul.f32 %v31, %v37
    %v39 = vsub.f32 %v36, %v38
    %v40 = vmax.f32 %v39, 0.0
    %v41 = vmul.f32 %v40, 0.003921569
    %v42 = vadd.f32 %v41, 1e-05
    %v43 = vrsqrt.pop %v42
    %v44 = vld [vmem:[%s1] sm:$0x3]
    %v45 = vld [vmem:[%s2] sm:$0x3]
    %v47 = vlaneseq
    %v48 = vshrl.u32 %v47, 7
    %v49 = vsub.s32 0, %v48
    %v50 = vrot.slane %v44, %v49
    %v51 = vlaneseq
    %v52 = vshrl.u32 %v51, 7
    %v53 = vsub.s32 1, %v52
    %v54 = vrot.slane %v44, %v53
    %v57 = vmul.f32 %v43, %v50
    %v58 = vmul.f32 %v43, %v54
    %v59 = vmul.f32 %v37, %v57
    %v60 = vmul.f32 %v37, %v58
    %v62 = vlaneseq
    %v63 = vshrl.u32 %v62, 7
    %v64 = vsub.s32 0, %v63
    %v65 = vrot.slane %v45, %v64
    %v66 = vlaneseq
    %v67 = vshrl.u32 %v66, 7
    %v68 = vsub.s32 1, %v67
    %v69 = vrot.slane %v45, %v68
    %v72 = vsub.f32 %v65, %v59
    %v73 = vsub.f32 %v69, %v60
    %v74 = vmul.f32 %v27, %v57
    %v75 = vmul.f32 %v28, %v58
    %v76 = vadd.f32 %v74, %v72
    %v77 = vadd.f32 %v75, %v73
    %78 = vst [vmem:[#allocation5] sm:$0xff] %v76
    %79 = vst [vmem:[#allocation5 + $0x8] sm:$0xff] %v77
    // Predicated region
    $region18: #{tpu_custom_call.1} parent=1 // pred_check
      _
    $region19: #{tpu_custom_call.1} parent=1 // pred_check_branch
      %81 = sbr.rel (0) target = $region21
    $region20: #{tpu_custom_call.1} parent=1 // pred_region
      %s83 = ssub.s32 256, 256
      %84 = vsyncadd [#allocation4], %s83
      %s86 = sshll.u32 [#allocation5], 4
      %s87 = int_to_ptr.vmem [resolvable:$true] %s86
      %89 = dma.vmem_to_hbm [thread:$0]  %s87, 256, %s3, [#allocation4]
    $region21: #{tpu_custom_call.1} parent=1 // pred_fallthru
      _
    // Predicated region
    $region22: #{tpu_custom_call.1} parent=1 // pred_check
      _
    $region23: #{tpu_custom_call.1} parent=1 // pred_check_branch
      %91 = sbr.rel (0) target = $region25
    $region24: #{tpu_custom_call.1} parent=1 // pred_region
      %92 = dma.done [#allocation4], 256
    $region25: #{tpu_custom_call.1} parent=1 // pred_fallthru
      _
    %93 = vsyncpa [#allocation3], 1
    %94 = vsyncpa [#allocation4], 1

</llo_original>
